<compile_context>
chip_gen: v7x
topology: tpu7x:2x2x1
jax: 0.10.0
libtpu: 0.0.40
codegen_flags: <defaults>
</compile_context>

<pallas_src>
import functools

import jax
import jax.numpy as jnp
import numpy as np
from jax.experimental import pallas as pl
from jax.experimental.pallas import tpu as pltpu

_LANE_TILE = 512            # max lane tile when C is a large multiple of 128
_BLOCK_BUDGET = 2 << 20     # target bytes of (input + output) rows per batch-group
_WANT_STEPS = 4             # aim for >= this many parallel grid steps (2 TCs x pipeline)


def _moving_avg_kernel(a_ref, x_ref, o_ref, *, inv_k):
    """a_ref: (L_out, L) integer band weights, x_ref: (Bb, L, Ct), o_ref: (Bb, L_out, Ct)."""
    bb = x_ref.shape[0]
    for b in range(bb):  # static, small; each iteration is one independent MXU matmul
        acc = jnp.dot(a_ref[...], x_ref[b], preferred_element_type=jnp.float32)
        o_ref[b] = (acc * np.float32(inv_k)).astype(o_ref.dtype)


def moving_avg(x, kernel_size, stride=1):
    """JAX/Pallas equivalent of the PyTorch moving_avg.forward.

    Args:
      x: (B, L, C) array.
      kernel_size: moving-average window.
      stride: AvgPool1d stride.
    Returns:
      (B, L_out, C) moving average, L_out = (L + 2*((K-1)//2) - K)//stride + 1.
    """
    B, L, C = x.shape
    k = int(kernel_size)
    s = int(stride)
    pad = (k - 1) // 2
    l_out = (L + 2 * pad - k) // s + 1

    # ---- constant band matrix folding replicate-pad + window-sum + stride ----
    rows = np.arange(l_out)[:, None] * s
    taps = np.arange(k)[None, :]
    src = np.clip(rows + taps - pad, 0, L - 1)                      # (l_out, k)
    a_np = np.zeros((l_out, L), dtype=np.float32)
    np.add.at(a_np, (np.repeat(np.arange(l_out), k), src.ravel()), 1.0)
    a = jnp.asarray(a_np, dtype=x.dtype)   # small-integer entries: exact even in bf16

    itemsize = jnp.dtype(x.dtype).itemsize

    # ---- lane tiling over channels (only when C is a big multiple of 128) ----
    if C % 128 == 0 and C > _LANE_TILE:
        ct = 128
        for cand in (_LANE_TILE, 384, 256):
            if C % cand == 0:
                ct = cand
                break
        nc = C // ct
    else:
        ct, nc = C, 1          # full-extent channel block (legal for any C)

    # ---- batch grouping: amortize per-step overhead, keep >= _WANT_STEPS steps ----
    bytes_per_batch = max(1, (L + l_out) * ct * itemsize)
    bb_cap = max(1, _BLOCK_BUDGET // bytes_per_batch)
    want_batch_steps = max(1, -(-_WANT_STEPS // nc))                # ceil(want / nc)
    bb = min(B, bb_cap, max(1, B // want_batch_steps))
    while B % bb:              # largest divisor of B not exceeding the target
        bb -= 1

    # ---- chip-aware VMEM limit (double-buffered in/out + A, capped for v7x) ----
    in_block = bb * L * ct * itemsize
    out_block = bb * l_out * ct * itemsize
    a_bytes = l_out * L * itemsize
    needed = 2 * (in_block + out_block + a_bytes) + (2 << 20)
    try:
        info = pltpu.get_tpu_info()
        vmem_cap = int(getattr(info, "vmem_capacity_bytes", 64 << 20))
    except Exception:
        vmem_cap = 64 << 20    # v7x per-TensorCore VMEM = smallest across generations
    vmem_limit = int(min(max(needed, 32 << 20), max(vmem_cap - (8 << 20), 32 << 20)))

    kernel = functools.partial(_moving_avg_kernel, inv_k=1.0 / k)

    return pl.pallas_call(
        kernel,
        out_shape=jax.ShapeDtypeStruct((B, l_out, C), x.dtype),
        grid_spec=pltpu.PrefetchScalarGridSpec(
            num_scalar_prefetch=0,
            grid=(B // bb, nc),
            in_specs=[
                pl.BlockSpec((l_out, L), lambda g, c: (0, 0)),      # A: fetched once
                pl.BlockSpec((bb, L, ct), lambda g, c: (g, 0, c)),
            ],
            out_specs=pl.BlockSpec((bb, l_out, ct), lambda g, c: (g, 0, c)),
        ),
        compiler_params=pltpu.CompilerParams(
            dimension_semantics=("parallel", "parallel"),
            vmem_limit_bytes=vmem_limit,
        ),
    )(a, x)


def _reference(x, kernel_size, stride=1):
    """Pure-JAX reference reproducing the PyTorch semantics exactly."""
    pad = (kernel_size - 1) // 2
    front = jnp.repeat(x[:, 0:1, :], pad, axis=1)
    end = jnp.repeat(x[:, -1:, :], pad, axis=1)
    xp = jnp.concatenate([front, x, end], axis=1)
    L = x.shape[1]
    l_pad = L + 2 * pad
    n_s1 = l_pad - kernel_size + 1
    mean_s1 = sum(xp[:, kk:kk + n_s1, :] for kk in range(kernel_size)) / kernel_size
    l_out = (l_pad - kernel_size) // stride + 1
    return mean_s1[:, ::stride, :][:, :l_out, :]


if __name__ == "__main__":
    k0, k1, k2 = jax.random.split(jax.random.PRNGKey(0), 3)

    def snap(v):
        # Snap test inputs to bf16-representable f32 values so the semantic check is
        # independent of how many MXU passes the compiler chooses for f32 matmuls.
        return v.astype(jnp.bfloat16).astype(jnp.float32)

    # Case 1: classic DLinear shape — 7 channels (not lane-aligned), K=25, stride=1.
    x1 = snap(jax.random.normal(k0, (4, 96, 7), dtype=jnp.float32))
    o1 = moving_avg(x1, 25, 1)
    jax.block_until_ready(o1)
    np.testing.assert_allclose(np.asarray(o1), np.asarray(_reference(x1, 25, 1)),
                               rtol=1e-5, atol=1e-5)

    # Case 2: lane-aligned channel count.
    x2 = snap(jax.random.normal(k1, (2, 64, 128), dtype=jnp.float32))
    o2 = moving_avg(x2, 25, 1)
    jax.block_until_ready(o2)
    np.testing.assert_allclose(np.asarray(o2), np.asarray(_reference(x2, 25, 1)),
                               rtol=1e-5, atol=1e-5)

    # Case 3: stride > 1 (strided output rows computed directly in-kernel via A).
    x3 = snap(jax.random.normal(k2, (2, 48, 16), dtype=jnp.float32))
    o3 = moving_avg(x3, 25, 4)
    jax.block_until_ready(o3)
    np.testing.assert_allclose(np.asarray(o3), np.asarray(_reference(x3, 25, 4)),
                               rtol=1e-5, atol=1e-5)

    print("KERNEL_OK")
</pallas_src>

<mosaic_0001>
module attributes {stable_mosaic.version = 11 : i64} {
  func.func @_moving_avg_kernel(%arg0: i32, %arg1: i32, %arg2: memref<96x96xf32, #tpu.memory_space<vmem>>, %arg3: memref<1x96x7xf32, #tpu.memory_space<vmem>>, %arg4: memref<1x96x7xf32, #tpu.memory_space<vmem>>) attributes {dimension_semantics = [#tpu.dimension_semantics<parallel>, #tpu.dimension_semantics<parallel>], iteration_bounds = array<i64: 4, 1>, scalar_prefetch = 0 : i64, scratch_operands = 0 : i64, tpu.core_type = #tpu.core_type<tc>, window_params = [{pipeline_mode = #tpu.pipeline_mode<synchronous>, transform_indices = @transform_0, window_bounds = array<i64: 96, 96>}, {transform_indices = @transform_1, window_bounds = array<i64: 1, 96, 7>}, {transform_indices = @transform_2, window_bounds = array<i64: 1, 96, 7>}]} {
    %c0 = arith.constant 0 : index
    %c0_0 = arith.constant 0 : index
    %0 = vector.load %arg2[%c0, %c0_0] : memref<96x96xf32, #tpu.memory_space<vmem>>, vector<96x96xf32>
    %c0_1 = arith.constant 0 : index
    %c0_2 = arith.constant 0 : index
    %c0_3 = arith.constant 0 : index
    %1 = vector.load %arg3[%c0_1, %c0_2, %c0_3] : memref<1x96x7xf32, #tpu.memory_space<vmem>>, vector<1x96x7xf32>
    %2 = vector.shape_cast %1 : vector<1x96x7xf32> to vector<96x7xf32>
    %cst = arith.constant dense<0.000000e+00> : vector<96x7xf32>
    %3 = tpu.matmul %0, %2, %cst {dimension_numbers = #tpu.dot_dimension_numbers<[1], [0], [0], [1], [0, 0, 1, 1], [], []>} : vector<96x96xf32>, vector<96x7xf32>, vector<96x7xf32> -> vector<96x7xf32>
    %cst_4 = arith.constant 4.000000e-02 : f32
    %4 = vector.broadcast %cst_4 : f32 to vector<96x7xf32>
    %5 = arith.mulf %3, %4 : vector<96x7xf32>
    %c0_5 = arith.constant 0 : index
    %c0_6 = arith.constant 0 : index
    %c0_7 = arith.constant 0 : index
    %6 = vector.load %arg4[%c0_5, %c0_6, %c0_7] : memref<1x96x7xf32, #tpu.memory_space<vmem>>, vector<1x96x7xf32>
    %7 = vector.shape_cast %6 : vector<1x96x7xf32> to vector<96x7xf32>
    %8 = vector.shape_cast %5 : vector<96x7xf32> to vector<1x96x7xf32>
    tpu.vector_store %arg4[%c0_5, %c0_6, %c0_7], %8 {strides = array<i32>} : memref<1x96x7xf32, #tpu.memory_space<vmem>>, vector<1x96x7xf32>,
    return
  }
  func.func @transform_0(%arg0: i32, %arg1: i32) -> (i32, i32) {
    %c0_i32 = arith.constant 0 : i32
    %c0_i32_0 = arith.constant 0 : i32
    %c0_i32_1 = arith.constant 0 : i32
    return %c0_i32, %c0_i32_0 : i32, i32
  }
  func.func @transform_1(%arg0: i32, %arg1: i32) -> (i32, i32, i32) {
    %c0_i32 = arith.constant 0 : i32
    %c0_i32_0 = arith.constant 0 : i32
    return %arg0, %c0_i32, %arg1 : i32, i32, i32
  }
  func.func @transform_2(%arg0: i32, %arg1: i32) -> (i32, i32, i32) {
    %c0_i32 = arith.constant 0 : i32
    %c0_i32_0 = arith.constant 0 : i32
    return %arg0, %c0_i32, %arg1 : i32, i32, i32
  }
}

</mosaic_0001>

<llo_original>
// kernel: tpu_custom_call.1
$region0: #{tpu_custom_call.1}
  #allocation0 [shape = 'u32[]', space=smem, size = 0x4, offset = 0x4, fixed_abs, tag = 'smem constant byte address 0x4 - core index']
  #allocation1 [shape = 'u32[144,128]{1,0:T(1,128)}', space=vmem, size = 0x12000, scoped, tag = 'internal scratch']
  %s0 = inlined_call_operand.vmem [shape: f32[96,96], index: 0, kind: input, shape index: {}]
  %s1 = inlined_call_operand.vmem [shape: f32[4,96,7], index: 1, kind: input, shape index: {}]
  %s2 = inlined_call_operand.vmem [shape: f32[4,96,7], index: 2, kind: output, shape index: {}]
  %s3 = sld [smem:[#allocation0]]
  $region41: #{tpu_custom_call.1} parent=0
    _
  %s5 = ssub.s32 1, %s3
  %s6 = scalar_select 0, %s5, %s3
  loop: start=0, step=1, limit=6
  $region2: #{tpu_custom_call.1} parent=0 // loop_pre_header
    _
  $region3: #{tpu_custom_call.1} parent=0 // loop_header
    %s8 = sphi 0, %s12
    %p9 = scmp.ge.s32.totalorder %s8, 6
    %s15 = sphi 0, %s27
    %s16 = sphi 0, %s23
    %s17 = sphi 0, %s15
    %s18 = sphi 0, %s16
    %s19 = sphi 0, %s17
    %s20 = sphi 0, %s18
    %s28 = sphi 0, %s28
    %s30 = sphi 0, %s28
    %s31 = sphi 0, %s30
    %s45 = sphi 0, %s31
    %s53 = sphi 0, %s55
    %s56 = sphi 0, %s53
    %s57 = sphi 0, %s56
    %s73 = sphi 0, %s57
    %s81 = sphi 0, %s83
    %s84 = sphi 0, %s81
    %s85 = sphi 0, %s84
    %s101 = sphi 0, %s85
  $region4: #{tpu_custom_call.1} parent=0 // loop_header_branch
    %11 = sbr.rel (%p9) target = $region8
  $region5: #{tpu_custom_call.1} parent=0 // loop_body
    %s13 = ssub.s32 %s8, 1
    %s14 = ssub.s32 %s8, 2
    %s21 = sadd.s32 1, %s16
    %p22 = scmp.ge.s32.totalorder %s21, 1
    %s23 = scalar_select %p22, 0, %s21
    %s24 = sadd.s32 1, %s15
    %s25 = scalar_select %p22, %s24, %s15
    %p26 = scmp.ge.s32.totalorder %s25, 4
    %s27 = scalar_select %p26, 0, %s25
    %s29 = sadd.s32 %s28, 1
    %p32 = scmp.eq.s32.totalorder %s8, 3
    %p33 = scmp.ne.s32.totalorder %s28, %s30
    %p34 = scmp.eq.s32.totalorder %s8, 0
    %p35 = por %p33, %p34
    %p36 = scmp.ne.s32.totalorder %s28, %s30
    %p37 = scmp.eq.s32.totalorder %s13, 3
    %p38 = por %p36, %p37
    %p39 = scmp.ne.s32.totalorder %s30, %s31
    %p40 = scmp.eq.s32.totalorder %s13, 0
    %p41 = por %p39, %p40
    %p42 = scmp.ne.s32.totalorder %s30, %s31
    %p43 = scmp.eq.s32.totalorder %s14, 3
    %p44 = por %p42, %p43
    %p46 = scmp.ne.s32.totalorder %s31, %s45
    %p47 = scmp.eq.s32.totalorder %s14, 0
    %p48 = por %p46, %p47
    %s49 = ssub.s32 %s15, %s27
    %s50 = ssub.s32 %s16, %s23
    %s51 = sor.u32 %s49, %s50
    %p52 = scmp.eq.s32.totalorder %s51, 0
    %s54 = sadd.s32 %s53, 1
    %s55 = scalar_select %p52, %s53, %s54
    %p58 = pneg %p52
    %p59 = scmp.eq.s32.totalorder %s8, 3
    %p60 = por %p58, %p59
    %p61 = scmp.ne.s32.totalorder %s53, %s56
    %p62 = scmp.eq.s32.totalorder %s8, 0
    %p63 = por %p61, %p62
    %p64 = scmp.ne.s32.totalorder %s53, %s56
    %p65 = scmp.eq.s32.totalorder %s13, 3
    %p66 = por %p64, %p65
    %p67 = scmp.ne.s32.totalorder %s56, %s57
    %p68 = scmp.eq.s32.totalorder %s13, 0
    %p69 = por %p67, %p68
    %p70 = scmp.ne.s32.totalorder %s56, %s57
    %p71 = scmp.eq.s32.totalorder %s14, 3
    %p72 = por %p70, %p71
    %p74 = scmp.ne.s32.totalorder %s57, %s73
    %p75 = scmp.eq.s32.totalorder %s14, 0
    %p76 = por %p74, %p75
    %s77 = ssub.s32 %s15, %s27
    %s78 = ssub.s32 %s16, %s23
    %s79 = sor.u32 %s77, %s78
    %p80 = scmp.eq.s32.totalorder %s79, 0
    %s82 = sadd.s32 %s81, 1
    %s83 = scalar_select %p80, %s81, %s82
    %p86 = pneg %p80
    %p87 = scmp.eq.s32.totalorder %s8, 3
    %p88 = por %p86, %p87
    %p89 = scmp.ne.s32.totalorder %s81, %s84
    %p90 = scmp.eq.s32.totalorder %s8, 0
    %p91 = por %p89, %p90
    %p92 = scmp.ne.s32.totalorder %s81, %s84
    %p93 = scmp.eq.s32.totalorder %s13, 3
    %p94 = por %p92, %p93
    %p95 = scmp.ne.s32.totalorder %s84, %s85
    %p96 = scmp.eq.s32.totalorder %s13, 0
    %p97 = por %p95, %p96
    %p98 = scmp.ne.s32.totalorder %s84, %s85
    %p99 = scmp.eq.s32.totalorder %s14, 3
    %p100 = por %p98, %p99
    %p102 = scmp.ne.s32.totalorder %s85, %s101
    %p103 = scmp.eq.s32.totalorder %s14, 0
    %p104 = por %p102, %p103
    %p105 = scmp.le.s32.totalorder 1, %s8
    %p106 = scmp.lt.s32.totalorder %s8, 5
    %p107 = pnand %p105, %p106
    %p108 = pneg %p107
    // Predicated region
    $region9: #{tpu_custom_call.1} parent=5 // pred_check
      _
    $region10: #{tpu_custom_call.1} parent=5 // pred_check_branch
      %110 = sbr.rel (%p107) target = $region12
    $region11: #{tpu_custom_call.1} parent=5 // pred_region
      %s111 = ssub.s32 %s8, 1
      // Predicated region
      $region13: #{tpu_custom_call.1} parent=11 // pred_check
        %p112 = pneg %p41
      $region14: #{tpu_custom_call.1} parent=11 // pred_check_branch
        %114 = sbr.rel (%p112) target = $region16
      $region15: #{tpu_custom_call.1} parent=11 // pred_region
        _
      $region16: #{tpu_custom_call.1} parent=11 // pred_fallthru
        _
    $region12: #{tpu_custom_call.1} parent=5 // pred_fallthru
      _
    %p115 = scmp.lt.s32.totalorder %s8, 4
    // Predicated region
    $region17: #{tpu_custom_call.1} parent=5 // pred_check
      %p116 = pneg %p115
    $region18: #{tpu_custom_call.1} parent=5 // pred_check_branch
      %118 = sbr.rel (%p116) target = $region20
    $region19: #{tpu_custom_call.1} parent=5 // pred_region
      // Predicated region
      $region21: #{tpu_custom_call.1} parent=19 // pred_check
        %p119 = pneg %p63
      $region22: #{tpu_custom_call.1} parent=19 // pred_check_branch
        %121 = sbr.rel (%p119) target = $region24
      $region23: #{tpu_custom_call.1} parent=19 // pred_region
        %p122 = scmp.lt.s32.totalorder %s15, 3
        %s123 = scalar_select %p122, %s15, 3
        %p124 = scmp.lt.s32.totalorder %s16, 0
        %s125 = scalar_select %p124, %s16, 0
        %s126 = smul.addr %s123, 12
        %s127 = sadd.s32 %s125, %s126
        %s128 = smul.addr %s127, 8
        %s129 = scalar_lea.vmem %s1, %s128
      $region24: #{tpu_custom_call.1} parent=19 // pred_fallthru
        _
    $region20: #{tpu_custom_call.1} parent=5 // pred_fallthru
      _
    %p130 = scmp.le.s32.totalorder 1, %s8
    %p131 = scmp.lt.s32.totalorder %s8, 5
    %p132 = pnand %p130, %p131
    %p133 = pneg %p132
    // Predicated region
    $region25: #{tpu_custom_call.1} parent=5 // pred_check
      _
    $region26: #{tpu_custom_call.1} parent=5 // pred_check_branch
      %135 = sbr.rel (%p132) target = $region28
    $region27: #{tpu_custom_call.1} parent=5 // pred_region
      %s136 = ssub.s32 %s8, 1
      %p137 = pneg %p41
      %p138 = pneg %p38
      %p139 = scmp.lt.s32.totalorder %s17, 3
      %s140 = scalar_select %p139, %s17, 3
      %p141 = scmp.lt.s32.totalorder %s18, 0
      %s142 = scalar_select %p141, %s18, 0
      %s143 = smul.addr %s140, 12
      %s144 = sadd.s32 %s142, %s143
      %s145 = smul.addr %s144, 8
      %s146 = scalar_lea.vmem %s1, %s145
      %p147 = pneg %p69
      %p148 = pneg %p66
      %p149 = pneg %p97
      %p150 = pneg %p94
      %p151 = scmp.lt.s32.totalorder %s17, 3
      %s152 = scalar_select %p151, %s17, 3
      %p153 = scmp.lt.s32.totalorder %s18, 0
      %s154 = scalar_select %p153, %s18, 0
      %s155 = smul.addr %s152, 12
      %s156 = sadd.s32 %s154, %s155
      %s157 = smul.addr %s156, 8
      %s158 = scalar_lea.vmem %s2, %s157
      %p159 = scmp.lt.s32.totalorder %s17, 3
      %s160 = scalar_select %p159, %s17, 3
      %p161 = scmp.lt.s32.totalorder %s18, 0
      %s162 = scalar_select %p161, %s18, 0
      %s163 = smul.addr %s160, 12
      %s164 = sadd.s32 %s162, %s163
      %s165 = smul.addr %s164, 8
      %s166 = scalar_lea.vmem %s1, %s165
      %p167 = scmp.lt.s32.totalorder %s17, 3
      %s168 = scalar_select %p167, %s17, 3
      %p169 = scmp.lt.s32.totalorder %s18, 0
      %s170 = scalar_select %p169, %s18, 0
      %s171 = smul.addr %s168, 12
      %s172 = sadd.s32 %s170, %s171
      %s173 = smul.addr %s172, 8
      %s174 = scalar_lea.vmem %s2, %s173
      %v175 = vld [vmem:[%s0] sm:$0xff]
      %v176 = vld [vmem:[%s0 + $0x8] sm:$0xff]
      %v177 = vld [vmem:[%s0 + $0x10] sm:$0xff]
      %v178 = vld [vmem:[%s0 + $0x18] sm:$0xff]
      %v179 = vld [vmem:[%s0 + $0x20] sm:$0xff]
      %v180 = vld [vmem:[%s0 + $0x28] sm:$0xff]
      %v181 = vld [vmem:[%s0 + $0x30] sm:$0xff]
      %v182 = vld [vmem:[%s0 + $0x38] sm:$0xff]
      %v183 = vld [vmem:[%s0 + $0x40] sm:$0xff]
      %v184 = vld [vmem:[%s0 + $0x48] sm:$0xff]
      %v185 = vld [vmem:[%s0 + $0x50] sm:$0xff]
      %v186 = vld [vmem:[%s0 + $0x58] sm:$0xff]
      %v187 = vld [vmem:[%s166] sm:$0xff]
      %v188 = vld [vmem:[%s166 + $0x8] sm:$0xff]
      %v189 = vld [vmem:[%s166 + $0x10] sm:$0xff]
      %v190 = vld [vmem:[%s166 + $0x18] sm:$0xff]
      %v191 = vld [vmem:[%s166 + $0x20] sm:$0xff]
      %v192 = vld [vmem:[%s166 + $0x28] sm:$0xff]
      %v193 = vld [vmem:[%s166 + $0x30] sm:$0xff]
      %v194 = vld [vmem:[%s166 + $0x38] sm:$0xff]
      %v195 = vld [vmem:[%s166 + $0x40] sm:$0xff]
      %v196 = vld [vmem:[%s166 + $0x48] sm:$0xff]
      %v197 = vld [vmem:[%s166 + $0x50] sm:$0xff]
      %v198 = vld [vmem:[%s166 + $0x58] sm:$0xff]
      %vm199 = vcmask 785408
      %v201 = vsel %vm199, %v175, 0
      %v204 = vsel %vm199, %v176, 0
      %v207 = vsel %vm199, %v177, 0
      %v210 = vsel %vm199, %v178, 0
      %v213 = vsel %vm199, %v179, 0
      %v216 = vsel %vm199, %v180, 0
      %v219 = vsel %vm199, %v181, 0
      %v222 = vsel %vm199, %v182, 0
      %v225 = vsel %vm199, %v183, 0
      %v228 = vsel %vm199, %v184, 0
      %v231 = vsel %vm199, %v185, 0
      %v234 = vsel %vm199, %v186, 0
      %236 = vmatprep.subr.mxu0 0.0
      %237 = vmatpush1.msra.mxu0 %v187
      %238 = vmatprep.subr.mxu0 0.0
      %239 = vmatpush1.msra.mxu0 %v188
      %240 = vmatprep.subr.mxu0 0.0
      %241 = vmatpush1.msra.mxu0 %v189
      %242 = vmatprep.subr.mxu0 0.0
      %243 = vmatpush1.msra.mxu0 %v190
      %244 = vmatprep.subr.mxu0 0.0
      %245 = vmatpush1.msra.mxu0 %v191
      %246 = vmatprep.subr.mxu0 0.0
      %247 = vmatpush1.msra.mxu0 %v192
      %248 = vmatprep.subr.mxu0 0.0
      %249 = vmatpush1.msra.mxu0 %v193
      %250 = vmatprep.subr.mxu0 0.0
      %251 = vmatpush1.msra.mxu0 %v194
      %252 = vmatprep.subr.mxu0 0.0
      %253 = vmatpush1.msra.mxu0 %v195
      %254 = vmatprep.subr.mxu0 0.0
      %255 = vmatpush1.msra.mxu0 %v196
      %256 = vmatprep.subr.mxu0 0.0
      %257 = vmatpush1.msra.mxu0 %v197
      %258 = vmatprep.subr.mxu0 0.0
      %259 = vmatpush1.msra.mxu0 %v198
      %260 = vmatprep.subr.mxu0 0.0
      %261 = vmatpush1.msra.mxu0 0.0
      %262 = vmatprep.subr.mxu0 0.0
      %263 = vmatpush1.msra.mxu0 0.0
      %264 = vmatprep.subr.mxu0 0.0
      %265 = vmatpush1.msra.mxu0 0.0
      %266 = vmatprep.subr.mxu0 0.0
      %267 = vmatpush1.msra.mxu0 0.0
      %268 = vmatprep.subr.mxu0 0.0
      %269 = vmatpush1.msra.mxu0 0.0
      %270 = vmatprep.subr.mxu0 0.0
      %271 = vmatpush1.msra.mxu0 0.0
      %272 = vmatprep.subr.mxu0 0.0
      %273 = vmatpush1.msra.mxu0 0.0
      %274 = vmatprep.subr.mxu0 0.0
      %275 = vmatpush1.msra.mxu0 0.0
      %276 = vmatprep.subr.mxu0 0.0
      %277 = vmatpush1.msra.mxu0 0.0
      %278 = vmatprep.subr.mxu0 0.0
      %279 = vmatpush1.msra.mxu0 0.0
      %280 = vmatprep.subr.mxu0 0.0
      %281 = vmatpush1.msra.mxu0 0.0
      %282 = vmatprep.subr.mxu0 0.0
      %283 = vmatpush1.msra.mxu0 0.0
      %284 = vmatprep.subr.mxu0 0.0
      %285 = vmatpush1.msra.mxu0 0.0
      %286 = vmatprep.subr.mxu0 0.0
      %287 = vmatpush1.msra.mxu0 0.0
      %288 = vmatprep.subr.mxu0 0.0
      %289 = vmatpush1.msra.mxu0 0.0
      %290 = vmatprep.subr.mxu0 0.0
      %291 = vmatpush1.msra.mxu0 0.0
      %292 = vmatprep.subr.mxu0 0.0
      %293 = vmatpush1.msra.mxu0 0.0
      %294 = vmatprep.subr.mxu0 0.0
      %295 = vmatpush1.msra.mxu0 0.0
      %296 = vmatprep.subr.mxu0 0.0
      %297 = vmatpush1.msra.mxu0 0.0
      %298 = vmatprep.subr.mxu0 0.0
      %299 = vmatpush1.msra.mxu0 0.0
      %300 = vmatprep.mubr.f32.mxu0 0.0
      %301 = vmatmul.mubr.f32.gmra.mrb[0].mxu0 %v201
      %v302 = vpop.f32.mrb[0].mxu0
      %v303 = vadd.f32 0.0, %v302
      %v304 = vpop.f32.mrb[0].mxu0
      %305 = vmatprep.mubr.f32.mxu0 0.0
      %306 = vmatmul.mubr.f32.gmra.mrb[0].mxu0 %v204
      %v307 = vpop.f32.mrb[0].mxu0
      %v308 = vadd.f32 0.0, %v307
      %v309 = vpop.f32.mrb[0].mxu0
      %310 = vmatprep.mubr.f32.mxu0 0.0
      %311 = vmatmul.mubr.f32.gmra.mrb[0].mxu0 %v207
      %v312 = vpop.f32.mrb[0].mxu0
      %v313 = vadd.f32 0.0, %v312
      %v314 = vpop.f32.mrb[0].mxu0
      %315 = vmatprep.mubr.f32.mxu0 0.0
      %316 = vmatmul.mubr.f32.gmra.mrb[0].mxu0 %v210
      %v317 = vpop.f32.mrb[0].mxu0
      %v318 = vadd.f32 0.0, %v317
      %v319 = vpop.f32.mrb[0].mxu0
      %320 = vmatprep.mubr.f32.mxu0 0.0
      %321 = vmatmul.mubr.f32.gmra.mrb[0].mxu0 %v213
      %v322 = vpop.f32.mrb[0].mxu0
      %v323 = vadd.f32 0.0, %v322
      %v324 = vpop.f32.mrb[0].mxu0
      %325 = vmatprep.mubr.f32.mxu0 0.0
      %326 = vmatmul.mubr.f32.gmra.mrb[0].mxu0 %v216
      %v327 = vpop.f32.mrb[0].mxu0
      %v328 = vadd.f32 0.0, %v327
      %v329 = vpop.f32.mrb[0].mxu0
      %330 = vmatprep.mubr.f32.mxu0 0.0
      %331 = vmatmul.mubr.f32.gmra.mrb[0].mxu0 %v219
      %v332 = vpop.f32.mrb[0].mxu0
      %v333 = vadd.f32 0.0, %v332
      %v334 = vpop.f32.mrb[0].mxu0
      %335 = vmatprep.mubr.f32.mxu0 0.0
      %336 = vmatmul.mubr.f32.gmra.mrb[0].mxu0 %v222
      %v337 = vpop.f32.mrb[0].mxu0
      %v338 = vadd.f32 0.0, %v337
      %v339 = vpop.f32.mrb[0].mxu0
      %340 = vmatprep.mubr.f32.mxu0 0.0
      %341 = vmatmul.mubr.f32.gmra.mrb[0].mxu0 %v225
      %v342 = vpop.f32.mrb[0].mxu0
      %v343 = vadd.f32 0.0, %v342
      %v344 = vpop.f32.mrb[0].mxu0
      %345 = vmatprep.mubr.f32.mxu0 0.0
      %346 = vmatmul.mubr.f32.gmra.mrb[0].mxu0 %v228
      %v347 = vpop.f32.mrb[0].mxu0
      %v348 = vadd.f32 0.0, %v347
      %v349 = vpop.f32.mrb[0].mxu0
      %350 = vmatprep.mubr.f32.mxu0 0.0
      %351 = vmatmul.mubr.f32.gmra.mrb[0].mxu0 %v231
      %v352 = vpop.f32.mrb[0].mxu0
      %v353 = vadd.f32 0.0, %v352
      %v354 = vpop.f32.mrb[0].mxu0
      %355 = vmatprep.mubr.f32.mxu0 0.0
      %356 = vmatmul.mubr.f32.gmra.mrb[0].mxu0 %v234
      %v357 = vpop.f32.mrb[0].mxu0
      %v358 = vadd.f32 0.0, %v357
      %v359 = vpop.f32.mrb[0].mxu0
      %360 = vdwg.mxu0
      %v361 = vmul.f32 %v303, 0.04
      %v362 = vmul.f32 %v308, 0.04
      %v363 = vmul.f32 %v313, 0.04
      %v364 = vmul.f32 %v318, 0.04
      %v365 = vmul.f32 %v323, 0.04
      %v366 = vmul.f32 %v328, 0.04
      %v367 = vmul.f32 %v333, 0.04
      %v368 = vmul.f32 %v338, 0.04
      %v369 = vmul.f32 %v343, 0.04
      %v370 = vmul.f32 %v348, 0.04
      %v371 = vmul.f32 %v353, 0.04
      %v372 = vmul.f32 %v358, 0.04
      %vm373 = vcmask 56320
      %374 = vst.msk [vmem:[%s174] sm:$0xff] %vm373, %v361
      %375 = vst.msk [vmem:[%s174 + $0x8] sm:$0xff] %vm373, %v362
      %376 = vst.msk [vmem:[%s174 + $0x10] sm:$0xff] %vm373, %v363
      %377 = vst.msk [vmem:[%s174 + $0x18] sm:$0xff] %vm373, %v364
      %378 = vst.msk [vmem:[%s174 + $0x20] sm:$0xff] %vm373, %v365
      %379 = vst.msk [vmem:[%s174 + $0x28] sm:$0xff] %vm373, %v366
      %380 = vst.msk [vmem:[%s174 + $0x30] sm:$0xff] %vm373, %v367
      %381 = vst.msk [vmem:[%s174 + $0x38] sm:$0xff] %vm373, %v368
      %382 = vst.msk [vmem:[%s174 + $0x40] sm:$0xff] %vm373, %v369
      %383 = vst.msk [vmem:[%s174 + $0x48] sm:$0xff] %vm373, %v370
      %384 = vst.msk [vmem:[%s174 + $0x50] sm:$0xff] %vm373, %v371
      %385 = vst.msk [vmem:[%s174 + $0x58] sm:$0xff] %vm373, %v372
      %p386 = scmp.lt.s32.totalorder %s17, 3
      %s387 = scalar_select %p386, %s17, 3
      %p388 = scmp.lt.s32.totalorder %s18, 0
      %s389 = scalar_select %p388, %s18, 0
      %s390 = smul.addr %s387, 12
      %s391 = sadd.s32 %s389, %s390
      %s392 = smul.addr %s391, 8
      %s393 = scalar_lea.vmem %s2, %s392
      // Predicated region
      $region29: #{tpu_custom_call.1} parent=27 // pred_check
        %p394 = pneg %p94
      $region30: #{tpu_custom_call.1} parent=27 // pred_check_branch
        %396 = sbr.rel (%p394) target = $region32
      $region31: #{tpu_custom_call.1} parent=27 // pred_region
        _
      $region32: #{tpu_custom_call.1} parent=27 // pred_fallthru
        _
    $region28: #{tpu_custom_call.1} parent=5 // pred_fallthru
      _
    %p397 = scmp.le.s32.totalorder 2, %s8
    // Predicated region
    $region33: #{tpu_custom_call.1} parent=5 // pred_check
      %p398 = pneg %p397
    $region34: #{tpu_custom_call.1} parent=5 // pred_check_branch
      %400 = sbr.rel (%p398) target = $region36
    $region35: #{tpu_custom_call.1} parent=5 // pred_region
      %s401 = ssub.s32 %s8, 2
      // Predicated region
      $region37: #{tpu_custom_call.1} parent=35 // pred_check
        %p402 = pneg %p100
      $region38: #{tpu_custom_call.1} parent=35 // pred_check_branch
        %404 = sbr.rel (%p402) target = $region40
      $region39: #{tpu_custom_call.1} parent=35 // pred_region
        %p405 = scmp.lt.s32.totalorder %s19, 3
        %s406 = scalar_select %p405, %s19, 3
        %p407 = scmp.lt.s32.totalorder %s20, 0
        %s408 = scalar_select %p407, %s20, 0
        %s409 = smul.addr %s406, 12
        %s410 = sadd.s32 %s408, %s409
        %s411 = smul.addr %s410, 8
        %s412 = scalar_lea.vmem %s2, %s411
      $region40: #{tpu_custom_call.1} parent=35 // pred_fallthru
        _
    $region36: #{tpu_custom_call.1} parent=5 // pred_fallthru
      _
  $region6: #{tpu_custom_call.1} parent=0 // loop_footer
    %s12 = sadd.s32 1, %s8
  $region7: #{tpu_custom_call.1} parent=0 // loop_footer_branch
    %7 = sbr.rel target = $region3
  $region8: #{tpu_custom_call.1} parent=0 // loop_exit
    _

</llo_original>
